<compile_context>
chip_gen: v5e
topology: v5e:2x2
jax: 0.10.0
libtpu: 0.0.40
codegen_flags: <defaults>
</compile_context>

<pallas_src>
import functools

import jax
import jax.numpy as jnp
from jax import lax
from jax.experimental import pallas as pl
from jax.experimental.pallas import tpu as pltpu

NUM_EXPERTS = 4
TOP_K = 2
LANE = 128


def _round_up(v, m):
    return ((v + m - 1) // m) * m


def moe_kernel(x_ref, wg_ref, bg_ref, wef_ref, bef_ref, out_ref, gw_ref,
               *, num_experts, top_k, h_pad):
    """One batch tile: gating + softmax + top-k + fused experts + combine."""
    E = num_experts

    x_f32 = x_ref[...]                                          # [tb, Dp] f32
    tb = x_f32.shape[0]

    # ---- gating network: logits = x @ Wg + bg -> [tb, E]  (tiny, f32) ----
    # Kept in f32 so top-k routing exactly matches the f32 reference.
    logits = jnp.dot(x_f32, wg_ref[...], preferred_element_type=jnp.float32)
    logits = logits + bg_ref[...]                               # (1, E) broadcast

    # ---- softmax over experts (dim=1) ----
    m = jnp.max(logits, axis=1, keepdims=True)
    ex = jnp.exp(logits - m)
    # Approx reciprocal -> EUP slot.  Common per-row positive scale: ordering
    # for top-k is unaffected and the error cancels in the exact renorm below.
    w = ex * pl.reciprocal(jnp.sum(ex, axis=1, keepdims=True), approx=True)

    # ---- top-k mask (iterative argmax; lowest-index tie-break) ----
    col = lax.broadcasted_iota(jnp.int32, (tb, E), 1)
    mask = jnp.zeros_like(w)
    wk = w
    for _ in range(top_k):
        mval = jnp.max(wk, axis=1, keepdims=True)
        cand = jnp.where(wk == mval, col, E)                    # E == "not selected"
        idx = jnp.min(cand, axis=1, keepdims=True)              # first max position
        onehot = col == idx
        mask = jnp.where(onehot, jnp.float32(1.0), mask)
        wk = jnp.where(onehot, jnp.float32(-1e30), wk)

    gw = w * mask
    denom = jnp.maximum(jnp.sum(gw, axis=1, keepdims=True), jnp.float32(1e-6))
    gw = gw / denom                                             # EXACT renormalization
    gw_ref[...] = gw.astype(gw_ref.dtype)

    # ---- all experts in ONE fused MXU matmul (bf16 in, f32 accumulate) ----
    x_bf = x_f32.astype(jnp.bfloat16)
    y_all = jnp.dot(x_bf, wef_ref[...],
                    preferred_element_type=jnp.float32)         # [tb, E*Hp]
    y_all = y_all + bef_ref[...]                                # (1, E*Hp) broadcast

    # ---- weighted combine: per-expert broadcast-MAC (lane-aligned slices) ----
    acc = gw[:, 0:1] * y_all[:, 0:h_pad]
    for e in range(1, E):
        acc = acc + gw[:, e:e + 1] * y_all[:, e * h_pad:(e + 1) * h_pad]
    out_ref[...] = acc.astype(out_ref.dtype)


def moe_forward(x, wg, bg, we, be, *, top_k=TOP_K, block_b=256):
    B, D = x.shape
    E, _, H = we.shape

    # ---- pad to lane/MXU-friendly sizes ----
    D_pad = _round_up(D, LANE)           # K dim of both matmuls
    H_pad = _round_up(H, LANE)           # per-expert lane slot
    Nf = E * H_pad                       # fused lane-dense N

    # Fused expert weights: [E, D, H] -> [Dp, E*Hp] (bf16), biases -> [1, E*Hp].
    we_p = jnp.pad(we.astype(jnp.float32),
                   ((0, 0), (0, D_pad - D), (0, H_pad - H)))
    we_flat = jnp.transpose(we_p, (1, 0, 2)).reshape(D_pad, Nf).astype(jnp.bfloat16)
    be_flat = jnp.pad(be.astype(jnp.float32),
                      ((0, 0), (0, H_pad - H))).reshape(1, Nf)
    wg_p = jnp.pad(wg.astype(jnp.float32), ((0, D_pad - D), (0, 0)))
    bg2 = bg.reshape(1, E).astype(jnp.float32)

    # ---- batch tiling: prefer >=2 grid steps when the batch allows ----
    B8 = _round_up(max(B, 1), 8)
    tb = min(block_b, B8)
    if B8 > 8 and pl.cdiv(B8, tb) < 2:
        tb = max(8, _round_up(pl.cdiv(B8, 2), 8))
    B_pad = _round_up(B8, tb)
    nb = B_pad // tb

    # Pad x with zeros (padded rows/cols are benign: softmax of bias only).
    x_p = jnp.pad(x.astype(jnp.float32), ((0, B_pad - B), (0, D_pad - D)))

    kernel = functools.partial(moe_kernel, num_experts=E, top_k=top_k,
                               h_pad=H_pad)

    # ---- VMEM budget ----
    # Resident weights are single-buffered (constant index_map); I/O tiles are
    # double-buffered; count the in-kernel f32 intermediates explicitly.
    weight_bytes = (we_flat.size * 2 + be_flat.size * 4
                    + wg_p.size * 4 + bg2.size * 4)
    io_bytes = 2 * tb * D_pad * 4 + 2 * tb * H_pad * 4 + 2 * tb * E * 4
    interm_bytes = (tb * Nf * 4            # y_all
                    + tb * H_pad * 4       # acc
                    + tb * D_pad * 2       # x bf16 cast
                    + 8 * tb * E * 4)      # gating/softmax/top-k temps
    vmem_limit = int(min(max(weight_bytes + io_bytes + 2 * interm_bytes
                             + (4 << 20), 16 << 20), 48 << 20))

    flops = 2 * B_pad * D_pad * E + 2 * B_pad * D_pad * Nf + 2 * B_pad * Nf
    bytes_accessed = (x_p.size * 4 + weight_bytes
                      + B_pad * H_pad * 4 + B_pad * E * 4)

    out_full, gw_full = pl.pallas_call(
        kernel,
        grid=(nb,),
        in_specs=[
            pl.BlockSpec((tb, D_pad), lambda i: (i, 0)),        # x: tiled over batch
            pl.BlockSpec((D_pad, E), lambda i: (0, 0)),         # gating W (resident)
            pl.BlockSpec((1, E), lambda i: (0, 0)),             # gating b (resident)
            pl.BlockSpec((D_pad, Nf), lambda i: (0, 0)),        # fused expert W
            pl.BlockSpec((1, Nf), lambda i: (0, 0)),            # fused expert b
        ],
        out_specs=(
            pl.BlockSpec((tb, H_pad), lambda i: (i, 0)),        # lane-dense out
            pl.BlockSpec((tb, E), lambda i: (i, 0)),            # gw (tiny, masked ok)
        ),
        out_shape=(
            jax.ShapeDtypeStruct((B_pad, H_pad), jnp.float32),
            jax.ShapeDtypeStruct((B_pad, E), jnp.float32),
        ),
        compiler_params=pltpu.CompilerParams(
            dimension_semantics=("parallel",),
            vmem_limit_bytes=vmem_limit,
        ),
        cost_estimate=pl.CostEstimate(
            flops=flops,
            transcendentals=B_pad * E + B_pad,
            bytes_accessed=bytes_accessed,
        ),
    )(x_p, wg_p, bg2, we_flat, be_flat)

    return out_full[:B, :H], gw_full[:B, :]


def moe_reference(x, wg, bg, we, be, *, top_k=TOP_K):
    """Pure-JAX (f32) reference mirroring the PyTorch forward."""
    logits = x @ wg + bg
    w = jax.nn.softmax(logits, axis=1)
    _, idx = lax.top_k(w, top_k)
    mask = jnp.zeros_like(w).at[jnp.arange(w.shape[0])[:, None], idx].set(1.0)
    gw = w * mask
    gw = gw / jnp.clip(jnp.sum(gw, axis=1, keepdims=True), 1e-6)
    expert_out = jnp.stack([x @ we[e] + be[e] for e in range(we.shape[0])], axis=1)
    out = jnp.sum(gw[:, :, None] * expert_out, axis=1)
    return out, gw


if __name__ == "__main__":
    B, D, H, E = 8, 32, 32, NUM_EXPERTS
    key = jax.random.PRNGKey(0)
    kx, kwg, kbg, kwe, kbe = jax.random.split(key, 5)

    x = jax.random.normal(kx, (B, D), jnp.float32)
    wg = jax.random.normal(kwg, (D, E), jnp.float32) * 0.1
    bg = jax.random.normal(kbg, (E,), jnp.float32) * 0.1
    we = jax.random.normal(kwe, (E, D, H), jnp.float32) * 0.1
    be = jax.random.normal(kbe, (E, H), jnp.float32) * 0.1

    out, gw = moe_forward(x, wg, bg, we, be)
    jax.block_until_ready(out)
    jax.block_until_ready(gw)

    ref_out, ref_gw = moe_reference(x, wg, bg, we, be)
    # Expert matmul runs with bf16 MXU inputs -> looser tolerance than the
    # pure-f32 reference; gating path is exact f32 so gw is tight.
    assert jnp.allclose(out, ref_out, atol=2e-2, rtol=2e-2), "output mismatch"
    assert jnp.allclose(gw, ref_gw, atol=1e-2, rtol=1e-2), "gating weights mismatch"

    print("KERNEL_OK")
</pallas_src>

<mosaic_0001>
module attributes {stable_mosaic.version = 11 : i64} {
  func.func @moe_kernel(%arg0: i32, %arg1: memref<8x128xf32, #tpu.memory_space<vmem>>, %arg2: memref<128x4xf32, #tpu.memory_space<vmem>>, %arg3: memref<1x4xf32, #tpu.memory_space<vmem>>, %arg4: memref<128x512xbf16, #tpu.memory_space<vmem>>, %arg5: memref<1x512xf32, #tpu.memory_space<vmem>>, %arg6: memref<8x128xf32, #tpu.memory_space<vmem>>, %arg7: memref<8x4xf32, #tpu.memory_space<vmem>>) attributes {dimension_semantics = [#tpu.dimension_semantics<parallel>], iteration_bounds = array<i64: 1>, scalar_prefetch = 0 : i64, scratch_operands = 0 : i64, tpu.core_type = #tpu.core_type<tc>, window_params = [{transform_indices = @transform_0, window_bounds = array<i64: 8, 128>}, {pipeline_mode = #tpu.pipeline_mode<synchronous>, transform_indices = @transform_1, window_bounds = array<i64: 128, 4>}, {pipeline_mode = #tpu.pipeline_mode<synchronous>, transform_indices = @transform_2, window_bounds = array<i64: 1, 4>}, {pipeline_mode = #tpu.pipeline_mode<synchronous>, transform_indices = @transform_3, window_bounds = array<i64: 128, 512>}, {pipeline_mode = #tpu.pipeline_mode<synchronous>, transform_indices = @transform_4, window_bounds = array<i64: 1, 512>}, {transform_indices = @transform_5, window_bounds = array<i64: 8, 128>}, {transform_indices = @transform_6, window_bounds = array<i64: 8, 4>}]} {
    %c0 = arith.constant 0 : index
    %c0_0 = arith.constant 0 : index
    %0 = vector.load %arg1[%c0, %c0_0] : memref<8x128xf32, #tpu.memory_space<vmem>>, vector<8x128xf32>
    %c0_1 = arith.constant 0 : index
    %c0_2 = arith.constant 0 : index
    %1 = vector.load %arg2[%c0_1, %c0_2] : memref<128x4xf32, #tpu.memory_space<vmem>>, vector<128x4xf32>
    %cst = arith.constant dense<0.000000e+00> : vector<8x4xf32>
    %2 = tpu.matmul %0, %1, %cst {dimension_numbers = #tpu.dot_dimension_numbers<[1], [0], [0], [1], [0, 0, 1, 1], [], []>} : vector<8x128xf32>, vector<128x4xf32>, vector<8x4xf32> -> vector<8x4xf32>
    %c0_3 = arith.constant 0 : index
    %c0_4 = arith.constant 0 : index
    %3 = vector.load %arg3[%c0_3, %c0_4] : memref<1x4xf32, #tpu.memory_space<vmem>>, vector<1x4xf32>
    %4 = vector.broadcast %3 : vector<1x4xf32> to vector<8x4xf32>
    %5 = arith.addf %2, %4 : vector<8x4xf32>
    %cst_5 = arith.constant dense<0xFF800000> : vector<8xf32>
    %6 = vector.multi_reduction <maximumf>, %5, %cst_5 [1] : vector<8x4xf32> to vector<8xf32>
    %7 = vector.shape_cast %6 : vector<8xf32> to vector<8x1xf32>
    %8 = vector.broadcast %7 : vector<8x1xf32> to vector<8x4xf32>
    %9 = arith.subf %5, %8 : vector<8x4xf32>
    %10 = math.exp %9 : vector<8x4xf32>
    %cst_6 = arith.constant dense<0.000000e+00> : vector<8xf32>
    %11 = vector.multi_reduction <add>, %10, %cst_6 [1] : vector<8x4xf32> to vector<8xf32>
    %12 = vector.shape_cast %11 : vector<8xf32> to vector<8x1xf32>
    %13 = tpu.reciprocal %12 {approx = true} : vector<8x1xf32> -> vector<8x1xf32>
    %14 = vector.broadcast %13 : vector<8x1xf32> to vector<8x4xf32>
    %15 = arith.mulf %10, %14 : vector<8x4xf32>
    %16 = tpu.iota {dimensions = array<i32: 1>} : vector<8x4xi32>
    %cst_7 = arith.constant 0.000000e+00 : f32
    %17 = vector.broadcast %cst_7 : f32 to vector<8x4xf32>
    %cst_8 = arith.constant dense<0xFF800000> : vector<8xf32>
    %18 = vector.multi_reduction <maximumf>, %15, %cst_8 [1] : vector<8x4xf32> to vector<8xf32>
    %19 = vector.shape_cast %18 : vector<8xf32> to vector<8x1xf32>
    %20 = vector.broadcast %19 : vector<8x1xf32> to vector<8x4xf32>
    %21 = arith.cmpf oeq, %15, %20 : vector<8x4xf32>
    %c4_i32 = arith.constant 4 : i32
    %22 = vector.broadcast %c4_i32 : i32 to vector<8x4xi32>
    %23 = arith.select %21, %16, %22 : vector<8x4xi1>, vector<8x4xi32>
    %cst_9 = arith.constant dense<2147483647> : vector<8xi32>
    %24 = vector.multi_reduction <minsi>, %23, %cst_9 [1] : vector<8x4xi32> to vector<8xi32>
    %25 = vector.shape_cast %24 : vector<8xi32> to vector<8x1xi32>
    %26 = vector.broadcast %25 : vector<8x1xi32> to vector<8x4xi32>
    %27 = arith.cmpi eq, %16, %26 : vector<8x4xi32>
    %cst_10 = arith.constant 1.000000e+00 : f32
    %28 = vector.broadcast %cst_10 : f32 to vector<8x4xf32>
    %29 = arith.select %27, %28, %17 : vector<8x4xi1>, vector<8x4xf32>
    %cst_11 = arith.constant -1.000000e+30 : f32
    %30 = vector.broadcast %cst_11 : f32 to vector<8x4xf32>
    %31 = arith.select %27, %30, %15 : vector<8x4xi1>, vector<8x4xf32>
    %cst_12 = arith.constant dense<0xFF800000> : vector<8xf32>
    %32 = vector.multi_reduction <maximumf>, %31, %cst_12 [1] : vector<8x4xf32> to vector<8xf32>
    %33 = vector.shape_cast %32 : vector<8xf32> to vector<8x1xf32>
    %34 = vector.broadcast %33 : vector<8x1xf32> to vector<8x4xf32>
    %35 = arith.cmpf oeq, %31, %34 : vector<8x4xf32>
    %c4_i32_13 = arith.constant 4 : i32
    %36 = vector.broadcast %c4_i32_13 : i32 to vector<8x4xi32>
    %37 = arith.select %35, %16, %36 : vector<8x4xi1>, vector<8x4xi32>
    %cst_14 = arith.constant dense<2147483647> : vector<8xi32>
    %38 = vector.multi_reduction <minsi>, %37, %cst_14 [1] : vector<8x4xi32> to vector<8xi32>
    %39 = vector.shape_cast %38 : vector<8xi32> to vector<8x1xi32>
    %40 = vector.broadcast %39 : vector<8x1xi32> to vector<8x4xi32>
    %41 = arith.cmpi eq, %16, %40 : vector<8x4xi32>
    %cst_15 = arith.constant 1.000000e+00 : f32
    %42 = vector.broadcast %cst_15 : f32 to vector<8x4xf32>
    %43 = arith.select %41, %42, %29 : vector<8x4xi1>, vector<8x4xf32>
    %44 = arith.mulf %15, %43 : vector<8x4xf32>
    %cst_16 = arith.constant dense<0.000000e+00> : vector<8xf32>
    %45 = vector.multi_reduction <add>, %44, %cst_16 [1] : vector<8x4xf32> to vector<8xf32>
    %46 = vector.shape_cast %45 : vector<8xf32> to vector<8x1xf32>
    %cst_17 = arith.constant 9.99999997E-7 : f32
    %47 = vector.broadcast %cst_17 : f32 to vector<8x1xf32>
    %48 = arith.maximumf %46, %47 : vector<8x1xf32>
    %49 = vector.broadcast %48 : vector<8x1xf32> to vector<8x4xf32>
    %50 = arith.divf %44, %49 : vector<8x4xf32>
    %c0_18 = arith.constant 0 : index
    %c0_19 = arith.constant 0 : index
    %51 = vector.load %arg7[%c0_18, %c0_19] : memref<8x4xf32, #tpu.memory_space<vmem>>, vector<8x4xf32>
    tpu.vector_store %arg7[%c0_18, %c0_19], %50 {strides = array<i32>} : memref<8x4xf32, #tpu.memory_space<vmem>>, vector<8x4xf32>,
    %52 = arith.truncf %0 : vector<8x128xf32> to vector<8x128xbf16>
    %c0_20 = arith.constant 0 : index
    %c0_21 = arith.constant 0 : index
    %53 = vector.load %arg4[%c0_20, %c0_21] : memref<128x512xbf16, #tpu.memory_space<vmem>>, vector<128x512xbf16>
    %cst_22 = arith.constant dense<0.000000e+00> : vector<8x512xf32>
    %54 = tpu.matmul %52, %53, %cst_22 {dimension_numbers = #tpu.dot_dimension_numbers<[1], [0], [0], [1], [0, 0, 1, 1], [], []>} : vector<8x128xbf16>, vector<128x512xbf16>, vector<8x512xf32> -> vector<8x512xf32>
    %c0_23 = arith.constant 0 : index
    %c0_24 = arith.constant 0 : index
    %55 = vector.load %arg5[%c0_23, %c0_24] : memref<1x512xf32, #tpu.memory_space<vmem>>, vector<1x512xf32>
    %56 = vector.broadcast %55 : vector<1x512xf32> to vector<8x512xf32>
    %57 = arith.addf %54, %56 : vector<8x512xf32>
    %58 = vector.extract_strided_slice %50 {offsets = [0, 0], sizes = [8, 1], strides = [1, 1]} : vector<8x4xf32> to vector<8x1xf32>
    %59 = vector.extract_strided_slice %57 {offsets = [0, 0], sizes = [8, 128], strides = [1, 1]} : vector<8x512xf32> to vector<8x128xf32>
    %60 = vector.broadcast %58 : vector<8x1xf32> to vector<8x128xf32>
    %61 = arith.mulf %60, %59 : vector<8x128xf32>
    %62 = vector.extract_strided_slice %50 {offsets = [0, 1], sizes = [8, 1], strides = [1, 1]} : vector<8x4xf32> to vector<8x1xf32>
    %63 = vector.extract_strided_slice %57 {offsets = [0, 128], sizes = [8, 128], strides = [1, 1]} : vector<8x512xf32> to vector<8x128xf32>
    %64 = vector.broadcast %62 : vector<8x1xf32> to vector<8x128xf32>
    %65 = arith.mulf %64, %63 : vector<8x128xf32>
    %66 = arith.addf %61, %65 : vector<8x128xf32>
    %67 = vector.extract_strided_slice %50 {offsets = [0, 2], sizes = [8, 1], strides = [1, 1]} : vector<8x4xf32> to vector<8x1xf32>
    %68 = vector.extract_strided_slice %57 {offsets = [0, 256], sizes = [8, 128], strides = [1, 1]} : vector<8x512xf32> to vector<8x128xf32>
    %69 = vector.broadcast %67 : vector<8x1xf32> to vector<8x128xf32>
    %70 = arith.mulf %69, %68 : vector<8x128xf32>
    %71 = arith.addf %66, %70 : vector<8x128xf32>
    %72 = vector.extract_strided_slice %50 {offsets = [0, 3], sizes = [8, 1], strides = [1, 1]} : vector<8x4xf32> to vector<8x1xf32>
    %73 = vector.extract_strided_slice %57 {offsets = [0, 384], sizes = [8, 128], strides = [1, 1]} : vector<8x512xf32> to vector<8x128xf32>
    %74 = vector.broadcast %72 : vector<8x1xf32> to vector<8x128xf32>
    %75 = arith.mulf %74, %73 : vector<8x128xf32>
    %76 = arith.addf %71, %75 : vector<8x128xf32>
    %c0_25 = arith.constant 0 : index
    %c0_26 = arith.constant 0 : index
    %77 = vector.load %arg6[%c0_25, %c0_26] : memref<8x128xf32, #tpu.memory_space<vmem>>, vector<8x128xf32>
    tpu.vector_store %arg6[%c0_25, %c0_26], %76 {strides = array<i32>} : memref<8x128xf32, #tpu.memory_space<vmem>>, vector<8x128xf32>,
    return
  }
  func.func @transform_0(%arg0: i32) -> (i32, i32) {
    %c0_i32 = arith.constant 0 : i32
    %c0_i32_0 = arith.constant 0 : i32
    return %arg0, %c0_i32 : i32, i32
  }
  func.func @transform_1(%arg0: i32) -> (i32, i32) {
    %c0_i32 = arith.constant 0 : i32
    %c0_i32_0 = arith.constant 0 : i32
    %c0_i32_1 = arith.constant 0 : i32
    return %c0_i32, %c0_i32_0 : i32, i32
  }
  func.func @transform_2(%arg0: i32) -> (i32, i32) {
    %c0_i32 = arith.constant 0 : i32
    %c0_i32_0 = arith.constant 0 : i32
    %c0_i32_1 = arith.constant 0 : i32
    return %c0_i32, %c0_i32_0 : i32, i32
  }
  func.func @transform_3(%arg0: i32) -> (i32, i32) {
    %c0_i32 = arith.constant 0 : i32
    %c0_i32_0 = arith.constant 0 : i32
    %c0_i32_1 = arith.constant 0 : i32
    return %c0_i32, %c0_i32_0 : i32, i32
  }
  func.func @transform_4(%arg0: i32) -> (i32, i32) {
    %c0_i32 = arith.constant 0 : i32
    %c0_i32_0 = arith.constant 0 : i32
    %c0_i32_1 = arith.constant 0 : i32
    return %c0_i32, %c0_i32_0 : i32, i32
  }
  func.func @transform_5(%arg0: i32) -> (i32, i32) {
    %c0_i32 = arith.constant 0 : i32
    %c0_i32_0 = arith.constant 0 : i32
    return %arg0, %c0_i32 : i32, i32
  }
  func.func @transform_6(%arg0: i32) -> (i32, i32) {
    %c0_i32 = arith.constant 0 : i32
    %c0_i32_0 = arith.constant 0 : i32
    return %arg0, %c0_i32 : i32, i32
  }
}

</mosaic_0001>

<llo_original>
// kernel: tpu_custom_call.1
$region0: #{tpu_custom_call.1}
  #allocation0 [shape = 'u32[]', space=smem, size = 0x4, offset = 0x4, fixed_abs, tag = 'smem constant byte address 0x4 - core index']
  #allocation1 [shape = 'u32[72,128]{1,0:T(1,128)}', space=vmem, size = 0x9000, scoped, tag = 'internal scratch']
  %s0 = inlined_call_operand.vmem [shape: f32[8,128], index: 0, kind: input, shape index: {}]
  %s1 = inlined_call_operand.vmem [shape: f32[128,4], index: 1, kind: input, shape index: {}]
  %s2 = inlined_call_operand.vmem [shape: f32[1,4], index: 2, kind: input, shape index: {}]
  %s3 = inlined_call_operand.hbm [shape: bf16[128,512], index: 3, kind: input, shape index: {}]
  %s4 = inlined_call_operand.vmem [shape: f32[1,512], index: 4, kind: input, shape index: {}]
  %s5 = inlined_call_operand.hbm [shape: f32[8,128], index: 5, kind: output, shape index: {0}]
  %s6 = inlined_call_operand.vmem [shape: f32[8,4], index: 6, kind: output, shape index: {1}]
  %7 = xla_tuple %s5, %s6
  %s8 = sld [smem:[#allocation0]]
  $region42: #{tpu_custom_call.1} parent=0
    _
  %s10 = ssub.s32 1, %s8
  %s11 = scalar_select 0, %s10, %s8
  $region1: #{tpu_custom_call.1} parent=0
    #allocation2 [shape = 'u8[131072]{0}', space=vmem, size = 0x20000, scoped, tag = 'input window, operand 3, single buffered']
    #allocation3 [shape = 's32[1]{0}', space=sflag, size = 0x4, scoped, tag = 'scoped memory for tpu_custom_call.1']
    #allocation4 [shape = 's32[1]{0}', space=sflag, size = 0x4, scoped, tag = 'scoped memory for tpu_custom_call.1']
    #allocation5 [shape = 'u8[4096]{0}', space=vmem, size = 0x1000, scoped, tag = 'output window, operand 0, single buffered']
    %12 = vsyncpa [#allocation3], 0
    %13 = vsyncpa [#allocation4], 0
    // Predicated region
    $region2: #{tpu_custom_call.1} parent=1 // pred_check
      _
    $region3: #{tpu_custom_call.1} parent=1 // pred_check_branch
      %15 = sbr.rel (0) target = $region5
    $region4: #{tpu_custom_call.1} parent=1 // pred_region
      _
    $region5: #{tpu_custom_call.1} parent=1 // pred_fallthru
      _
    // Predicated region
    $region6: #{tpu_custom_call.1} parent=1 // pred_check
      _
    $region7: #{tpu_custom_call.1} parent=1 // pred_check_branch
      %17 = sbr.rel (0) target = $region9
    $region8: #{tpu_custom_call.1} parent=1 // pred_region
      _
    $region9: #{tpu_custom_call.1} parent=1 // pred_fallthru
      _
    // Predicated region
    $region10: #{tpu_custom_call.1} parent=1 // pred_check
      _
    $region11: #{tpu_custom_call.1} parent=1 // pred_check_branch
      %19 = sbr.rel (0) target = $region13
    $region12: #{tpu_custom_call.1} parent=1 // pred_region
      _
    $region13: #{tpu_custom_call.1} parent=1 // pred_fallthru
      _
    // Predicated region
    $region14: #{tpu_custom_call.1} parent=1 // pred_check
      _
    $region15: #{tpu_custom_call.1} parent=1 // pred_check_branch
      %21 = sbr.rel (0) target = $region17
    $region16: #{tpu_custom_call.1} parent=1 // pred_region
      %23 = vsyncadd [#allocation3], 0
      %s24 = sshll.u32 %s3, 4
      %s25 = int_to_ptr.hbm [resolvable:$true] %s24
      %s26 = sshll.u32 [#allocation2], 4
      %s27 = int_to_ptr.vmem [resolvable:$true] %s26
      %32 = dma.hbm_to_vmem [thread:$0]  %s25, 4096, %s27, [#allocation3], 256, 256, 16
    $region17: #{tpu_custom_call.1} parent=1 // pred_fallthru
      _
    // Predicated region
    $region18: #{tpu_custom_call.1} parent=1 // pred_check
      _
    $region19: #{tpu_custom_call.1} parent=1 // pred_check_branch
      %34 = sbr.rel (0) target = $region21
    $region20: #{tpu_custom_call.1} parent=1 // pred_region
      _
    $region21: #{tpu_custom_call.1} parent=1 // pred_fallthru
      _
    // Predicated region
    $region22: #{tpu_custom_call.1} parent=1 // pred_check
      _
    $region23: #{tpu_custom_call.1} parent=1 // pred_check_branch
      %36 = sbr.rel (0) target = $region25
    $region24: #{tpu_custom_call.1} parent=1 // pred_region
      %38 = dma.done [#allocation3], 4096
    $region25: #{tpu_custom_call.1} parent=1 // pred_fallthru
      _
    %v39 = vld [vmem:[%s0] sm:$0xff]
    %v40 = vld [vmem:[%s1] sm:$0xff]
    %v41 = vld [vmem:[%s1 + $0x8] sm:$0xff]
    %v42 = vld [vmem:[%s1 + $0x10] sm:$0xff]
    %v43 = vld [vmem:[%s1 + $0x18] sm:$0xff]
    %v44 = vld [vmem:[%s1 + $0x20] sm:$0xff]
    %v45 = vld [vmem:[%s1 + $0x28] sm:$0xff]
    %v46 = vld [vmem:[%s1 + $0x30] sm:$0xff]
    %v47 = vld [vmem:[%s1 + $0x38] sm:$0xff]
    %v48 = vld [vmem:[%s1 + $0x40] sm:$0xff]
    %v49 = vld [vmem:[%s1 + $0x48] sm:$0xff]
    %v50 = vld [vmem:[%s1 + $0x50] sm:$0xff]
    %v51 = vld [vmem:[%s1 + $0x58] sm:$0xff]
    %v52 = vld [vmem:[%s1 + $0x60] sm:$0xff]
    %v53 = vld [vmem:[%s1 + $0x68] sm:$0xff]
    %v54 = vld [vmem:[%s1 + $0x70] sm:$0xff]
    %v55 = vld [vmem:[%s1 + $0x78] sm:$0xff]
    %v56 = vld [vmem:[%s2] sm:$0x1]
    %v58 = vperm.slane %v56, 0
    %60 = vmatpush.msra.mxu0 %v55
    %61 = vmatpush.msra.mxu0 %v54
    %62 = vmatpush.msra.mxu0 %v53
    %63 = vmatpush.msra.mxu0 %v52
    %64 = vmatpush.msra.mxu0 %v51
    %65 = vmatpush.msra.mxu0 %v50
    %66 = vmatpush.msra.mxu0 %v49
    %67 = vmatpush.msra.mxu0 %v48
    %68 = vmatpush.msra.mxu0 %v47
    %69 = vmatpush.msra.mxu0 %v46
    %70 = vmatpush.msra.mxu0 %v45
    %71 = vmatpush.msra.mxu0 %v44
    %72 = vmatpush.msra.mxu0 %v43
    %73 = vmatpush.msra.mxu0 %v42
    %74 = vmatpush.msra.mxu0 %v41
    %75 = vmatpush.msra.mxu0 %v40
    %76 = vmatmul.f32.gmra.mxu0 %v39
    %v77 = vpop.f32.mrf.mxu0
    %v78 = vadd.f32 %v58, %v77
    %79 = vdwg.mxu0
    %vm80 = vcmask 31744
    %v81 = vsel %vm80, %v78, -inf
    %82 = vmax.xlane.f32.xlu0 %v81
    %v83 = vpop.xlane.xlu0 %82
    %v84 = vsub.f32 %v78, %v83
    %v85 = vmul.f32 %v84, 1.442695
    %v86 = vpow.pop %v85
    %v87 = vsel %vm80, %v86, 0.0
    %88 = vadd.xlane.f32.xlu0 %v87
    %v89 = vpop.xlane.xlu0 %88
    %v90 = vrcp.pop %v89
    %v91 = vmul.f32 %v86, %v90
    %v92 = vlaneseq
    %v93 = vand.u32 %v92, 127
    %v94 = vsel %vm80, %v91, -inf
    %95 = vmax.xlane.f32.xlu0 %v94
    %v96 = vpop.xlane.xlu0 %95
    %vm97 = vcmp.eq.f32.partialorder %v91, %v96
    %v98 = vsel %vm97, %v93, 4
    %v99 = vsel %vm80, %v98, 2147483647
    %v100 = vand.u32 %v99, 65535
    %v101 = vshra.s32 %v99, 16
    %v102 = vcvt.s32.f32 %v100
    %v103 = vcvt.s32.f32 %v101
    %104 = vmin.xlane.f32.xlu0 %v103
    %v105 = vpop.xlane.xlu0 %104
    %vm106 = vcmp.eq.f32.partialorder %v103, %v105
    %v107 = vsel %vm106, %v102, inf
    %108 = vmin.xlane.f32.xlu0 %v107
    %v109 = vpop.xlane.xlu0 %108
    %v110 = vcvt.f32.s32 %v109
    %v111 = vcvt.f32.s32 %v105
    %v112 = vshll.u32 %v111, 16
    %v113 = vadd.s32 %v112, %v110
    %vm114 = vcmp.eq.s32.totalorder %v93, %v113
    %v115 = vsel %vm114, 1.0, 0.0
    %v116 = vsel %vm114, -1e+30, %v91
    %v117 = vsel %vm80, %v116, -inf
    %118 = vmax.xlane.f32.xlu0 %v117
    %v119 = vpop.xlane.xlu0 %118
    %vm120 = vcmp.eq.f32.partialorder %v116, %v119
    %v121 = vsel %vm120, %v93, 4
    %v122 = vsel %vm80, %v121, 2147483647
    %v123 = vand.u32 %v122, 65535
    %v124 = vshra.s32 %v122, 16
    %v125 = vcvt.s32.f32 %v123
    %v126 = vcvt.s32.f32 %v124
    %127 = vmin.xlane.f32.xlu0 %v126
    %v128 = vpop.xlane.xlu0 %127
    %vm129 = vcmp.eq.f32.partialorder %v126, %v128
    %v130 = vsel %vm129, %v125, inf
    %131 = vmin.xlane.f32.xlu0 %v130
    %v132 = vpop.xlane.xlu0 %131
    %v133 = vcvt.f32.s32 %v132
    %v134 = vcvt.f32.s32 %v128
    %v135 = vshll.u32 %v134, 16
    %v136 = vadd.s32 %v135, %v133
    %vm137 = vcmp.eq.s32.totalorder %v93, %v136
    %v138 = vsel %vm137, 1.0, %v115
    %v139 = vmul.f32 %v91, %v138
    %v140 = vsel %vm80, %v139, 0.0
    %141 = vadd.xlane.f32.xlu0 %v140
    %v142 = vpop.xlane.xlu0 %141
    %v143 = vmax.f32 %v142, 1e-06
    %v144 = vrcp.pop %v143
    %v145 = vmul.f32 %v143, %v144
    %v146 = vsub.f32 1.0, %v145
    %v147 = vmul.f32 %v144, %v146
    %v148 = vadd.f32 %v144, %v147
    %vm149 = vweird.f32 %v143
    %vm150 = vweird.f32 %v144
    %vm151 = vmor %vm149, %vm150
    %v152 = vsel %vm151, %v144, %v148
    %v153 = vand.u32 2147483647, %v143
    %vm154 = vcmp.eq.f32.partialorder %v153, 8.507059e+37
    %v155 = vand.u32 %v143, 2147483648
    %v156 = vor.u32 1.1754944e-38, %v155
    %v157 = vsel %vm154, %v156, %v152
    %v158 = vmul.f32 %v139, %v157
    %159 = vst.msk [vmem:[%s6] sm:$0xff] %vm80, %v158
    %v160 = vpack.c.bf16 %v39, %v39
    %v161 = vld [vmem:[#allocation2] sm:$0xff]
    %v162 = vld [vmem:[#allocation2 + $0x8] sm:$0xff]
    %v163 = vld [vmem:[#allocation2 + $0x10] sm:$0xff]
    %v164 = vld [vmem:[#allocation2 + $0x18] sm:$0xff]
    %v165 = vld [vmem:[#allocation2 + $0x20] sm:$0xff]
    %v166 = vld [vmem:[#allocation2 + $0x28] sm:$0xff]
    %v167 = vld [vmem:[#allocation2 + $0x30] sm:$0xff]
    %v168 = vld [vmem:[#allocation2 + $0x38] sm:$0xff]
    %v169 = vld [vmem:[#allocation2 + $0x40] sm:$0xff]
    %v170 = vld [vmem:[#allocation2 + $0x48] sm:$0xff]
    %v171 = vld [vmem:[#allocation2 + $0x50] sm:$0xff]
    %v172 = vld [vmem:[#allocation2 + $0x58] sm:$0xff]
    %v173 = vld [vmem:[#allocation2 + $0x60] sm:$0xff]
    %v174 = vld [vmem:[#allocation2 + $0x68] sm:$0xff]
    %v175 = vld [vmem:[#allocation2 + $0x70] sm:$0xff]
    %v176 = vld [vmem:[#allocation2 + $0x78] sm:$0xff]
    %v177 = vld [vmem:[#allocation2 + $0x80] sm:$0xff]
    %v178 = vld [vmem:[#allocation2 + $0x88] sm:$0xff]
    %v179 = vld [vmem:[#allocation2 + $0x90] sm:$0xff]
    %v180 = vld [vmem:[#allocation2 + $0x98] sm:$0xff]
    %v181 = vld [vmem:[#allocation2 + $0xa0] sm:$0xff]
    %v182 = vld [vmem:[#allocation2 + $0xa8] sm:$0xff]
    %v183 = vld [vmem:[#allocation2 + $0xb0] sm:$0xff]
    %v184 = vld [vmem:[#allocation2 + $0xb8] sm:$0xff]
    %v185 = vld [vmem:[#allocation2 + $0xc0] sm:$0xff]
    %v186 = vld [vmem:[#allocation2 + $0xc8] sm:$0xff]
    %v187 = vld [vmem:[#allocation2 + $0xd0] sm:$0xff]
    %v188 = vld [vmem:[#allocation2 + $0xd8] sm:$0xff]
    %v189 = vld [vmem:[#allocation2 + $0xe0] sm:$0xff]
    %v190 = vld [vmem:[#allocation2 + $0xe8] sm:$0xff]
    %v191 = vld [vmem:[#allocation2 + $0xf0] sm:$0xff]
    %v192 = vld [vmem:[#allocation2 + $0xf8] sm:$0xff]
    %v193 = vld [vmem:[%s4] sm:$0xf]
    %v195 = vperm.slane %v193, 0
    %v196 = vperm.slane %v193, 1
    %v197 = vperm.slane %v193, 2
    %v198 = vperm.slane %v193, 3
    %v235 = vunpack.c.l.b16 %v161
    %v236 = vunpack.c.h.b16 %v161
    %v237 = vunpack.c.l.b16 %v162
    %v238 = vunpack.c.h.b16 %v162
    %v239 = vunpack.c.l.b16 %v163
    %v240 = vunpack.c.h.b16 %v163
    %v241 = vunpack.c.l.b16 %v164
    %v242 = vunpack.c.h.b16 %v164
    %v243 = vunpack.c.l.b16 %v165
    %v244 = vunpack.c.h.b16 %v165
    %v245 = vunpack.c.l.b16 %v166
    %v246 = vunpack.c.h.b16 %v166
    %v247 = vunpack.c.l.b16 %v167
    %v248 = vunpack.c.h.b16 %v167
    %v249 = vunpack.c.l.b16 %v168
    %v250 = vunpack.c.h.b16 %v168
    %v251 = vunpack.c.l.b16 %v169
    %v252 = vunpack.c.h.b16 %v169
    %v253 = vunpack.c.l.b16 %v170
    %v254 = vunpack.c.h.b16 %v170
    %v255 = vunpack.c.l.b16 %v171
    %v256 = vunpack.c.h.b16 %v171
    %v257 = vunpack.c.l.b16 %v172
    %v258 = vunpack.c.h.b16 %v172
    %v259 = vunpack.c.l.b16 %v173
    %v260 = vunpack.c.h.b16 %v173
    %v261 = vunpack.c.l.b16 %v174
    %v262 = vunpack.c.h.b16 %v174
    %v263 = vunpack.c.l.b16 %v175
    %v264 = vunpack.c.h.b16 %v175
    %v265 = vunpack.c.l.b16 %v176
    %v266 = vunpack.c.h.b16 %v176
    %v267 = vunpack.c.l.b16 %v177
    %v268 = vunpack.c.h.b16 %v177
    %v269 = vunpack.c.l.b16 %v178
    %v270 = vunpack.c.h.b16 %v178
    %v271 = vunpack.c.l.b16 %v179
    %v272 = vunpack.c.h.b16 %v179
    %v273 = vunpack.c.l.b16 %v180
    %v274 = vunpack.c.h.b16 %v180
    %v275 = vunpack.c.l.b16 %v181
    %v276 = vunpack.c.h.b16 %v181
    %v277 = vunpack.c.l.b16 %v182
    %v278 = vunpack.c.h.b16 %v182
    %v279 = vunpack.c.l.b16 %v183
    %v280 = vunpack.c.h.b16 %v183
    %v281 = vunpack.c.l.b16 %v184
    %v282 = vunpack.c.h.b16 %v184
    %v283 = vunpack.c.l.b16 %v185
    %v284 = vunpack.c.h.b16 %v185
    %v285 = vunpack.c.l.b16 %v186
    %v286 = vunpack.c.h.b16 %v186
    %v287 = vunpack.c.l.b16 %v187
    %v288 = vunpack.c.h.b16 %v187
    %v289 = vunpack.c.l.b16 %v188
    %v290 = vunpack.c.h.b16 %v188
    %v291 = vunpack.c.l.b16 %v189
    %v292 = vunpack.c.h.b16 %v189
    %v293 = vunpack.c.l.b16 %v190
    %v294 = vunpack.c.h.b16 %v190
    %v295 = vunpack.c.l.b16 %v191
    %v296 = vunpack.c.h.b16 %v191
    %v297 = vunpack.c.l.b16 %v192
    %v298 = vunpack.c.h.b16 %v192
    %v299 = vpack.c.b16 %v239, %v235
    %v300 = vpack.c.b16 %v240, %v236
    %v301 = vpack.c.b16 %v241, %v237
    %v302 = vpack.c.b16 %v242, %v238
    %v303 = vpack.c.b16 %v247, %v243
    %v304 = vpack.c.b16 %v248, %v244
    %v305 = vpack.c.b16 %v249, %v245
    %v306 = vpack.c.b16 %v250, %v246
    %v307 = vpack.c.b16 %v255, %v251
    %v308 = vpack.c.b16 %v256, %v252
    %v309 = vpack.c.b16 %v257, %v253
    %v310 = vpack.c.b16 %v258, %v254
    %v311 = vpack.c.b16 %v263, %v259
    %v312 = vpack.c.b16 %v264, %v260
    %v313 = vpack.c.b16 %v265, %v261
    %v314 = vpack.c.b16 %v266, %v262
    %v315 = vpack.c.b16 %v271, %v267
    %v316 = vpack.c.b16 %v272, %v268
    %v317 = vpack.c.b16 %v273, %v269
    %v318 = vpack.c.b16 %v274, %v270
    %v319 = vpack.c.b16 %v279, %v275
    %v320 = vpack.c.b16 %v280, %v276
    %v321 = vpack.c.b16 %v281, %v277
    %v322 = vpack.c.b16 %v282, %v278
    %v323 = vpack.c.b16 %v287, %v283
    %v324 = vpack.c.b16 %v288, %v284
    %v325 = vpack.c.b16 %v289, %v285
    %v326 = vpack.c.b16 %v290, %v286
    %v327 = vpack.c.b16 %v295, %v291
    %v328 = vpack.c.b16 %v296, %v292
    %v329 = vpack.c.b16 %v297, %v293
    %v330 = vpack.c.b16 %v298, %v294
    %363 = vmatpush.bf16.msra.mxu0 %v327
    %364 = vmatpush.bf16.msra.mxu0 %v323
    %365 = vmatpush.bf16.msra.mxu0 %v319
    %366 = vmatpush.bf16.msra.mxu0 %v315
    %367 = vmatpush.bf16.msra.mxu0 %v311
    %368 = vmatpush.bf16.msra.mxu0 %v307
    %369 = vmatpush.bf16.msra.mxu0 %v303
    %370 = vmatpush.bf16.msra.mxu0 %v299
    %371 = vmatmul.bf16.gmra.mxu0 %v160
    %v372 = vpop.f32.mrf.mxu0
    %v373 = vadd.f32 %v195, %v372
    %v374 = vpop.f32.mrf.mxu0
    %375 = vdwg.mxu0
    %376 = vmatpush.bf16.msra.mxu0 %v328
    %377 = vmatpush.bf16.msra.mxu0 %v324
    %378 = vmatpush.bf16.msra.mxu0 %v320
    %379 = vmatpush.bf16.msra.mxu0 %v316
    %380 = vmatpush.bf16.msra.mxu0 %v312
    %381 = vmatpush.bf16.msra.mxu0 %v308
    %382 = vmatpush.bf16.msra.mxu0 %v304
    %383 = vmatpush.bf16.msra.mxu0 %v300
    %384 = vmatmul.bf16.gmra.mxu0 %v160
    %v385 = vpop.f32.mrf.mxu0
    %v386 = vadd.f32 %v196, %v385
    %v387 = vpop.f32.mrf.mxu0
    %388 = vdwg.mxu0
    %389 = vmatpush.bf16.msra.mxu0 %v329
    %390 = vmatpush.bf16.msra.mxu0 %v325
    %391 = vmatpush.bf16.msra.mxu0 %v321
    %392 = vmatpush.bf16.msra.mxu0 %v317
    %393 = vmatpush.bf16.msra.mxu0 %v313
    %394 = vmatpush.bf16.msra.mxu0 %v309
    %395 = vmatpush.bf16.msra.mxu0 %v305
    %396 = vmatpush.bf16.msra.mxu0 %v301
    %397 = vmatmul.bf16.gmra.mxu0 %v160
    %v398 = vpop.f32.mrf.mxu0
    %v399 = vadd.f32 %v197, %v398
    %v400 = vpop.f32.mrf.mxu0
    %401 = vdwg.mxu0
    %402 = vmatpush.bf16.msra.mxu0 %v330
    %403 = vmatpush.bf16.msra.mxu0 %v326
    %404 = vmatpush.bf16.msra.mxu0 %v322
    %405 = vmatpush.bf16.msra.mxu0 %v318
    %406 = vmatpush.bf16.msra.mxu0 %v314
    %407 = vmatpush.bf16.msra.mxu0 %v310
    %408 = vmatpush.bf16.msra.mxu0 %v306
    %409 = vmatpush.bf16.msra.mxu0 %v302
    %410 = vmatmul.bf16.gmra.mxu0 %v160
    %v411 = vpop.f32.mrf.mxu0
    %v412 = vadd.f32 %v198, %v411
    %v413 = vpop.f32.mrf.mxu0
    %414 = vdwg.mxu0
    %416 = vset.pattern.permute.xlu0 0
    %417 = vperm.xlu0 %416, %v158
    %v418 = vpop.permute.xlu0 %417
    %v420 = vmul.f32 %v418, %v373
    %421 = vset.pattern.permute.xlu0 1
    %422 = vperm.xlu0 %421, %v158
    %v423 = vpop.permute.xlu0 %422
    %v425 = vmul.f32 %v423, %v386
    %v426 = vadd.f32 %v420, %v425
    %427 = vset.pattern.permute.xlu0 2
    %428 = vperm.xlu0 %427, %v158
    %v429 = vpop.permute.xlu0 %428
    %v431 = vmul.f32 %v429, %v399
    %v432 = vadd.f32 %v426, %v431
    %433 = vset.pattern.permute.xlu0 3
    %434 = vperm.xlu0 %433, %v158
    %v435 = vpop.permute.xlu0 %434
    %v437 = vmul.f32 %v435, %v412
    %v438 = vadd.f32 %v432, %v437
    %439 = vst [vmem:[#allocation5] sm:$0xff] %v438
    // Predicated region
    $region26: #{tpu_custom_call.1} parent=1 // pred_check
      _
    $region27: #{tpu_custom_call.1} parent=1 // pred_check_branch
      %441 = sbr.rel (0) target = $region29
    $region28: #{tpu_custom_call.1} parent=1 // pred_region
      %443 = vsyncadd [#allocation4], 0
      %s445 = sshll.u32 [#allocation5], 4
      %s446 = int_to_ptr.vmem [resolvable:$true] %s445
      %s447 = sshll.u32 %s5, 4
      %s448 = int_to_ptr.hbm [resolvable:$true] %s447
      %450 = dma.vmem_to_hbm [thread:$0]  %s446, 128, %s448, [#allocation4]
    $region29: #{tpu_custom_call.1} parent=1 // pred_fallthru
      _
    // Predicated region
    $region30: #{tpu_custom_call.1} parent=1 // pred_check
      _
    $region31: #{tpu_custom_call.1} parent=1 // pred_check_branch
      %452 = sbr.rel (0) target = $region33
    $region32: #{tpu_custom_call.1} parent=1 // pred_region
      _
    $region33: #{tpu_custom_call.1} parent=1 // pred_fallthru
      _
    // Predicated region
    $region34: #{tpu_custom_call.1} parent=1 // pred_check
      _
    $region35: #{tpu_custom_call.1} parent=1 // pred_check_branch
      %454 = sbr.rel (0) target = $region37
    $region36: #{tpu_custom_call.1} parent=1 // pred_region
      %456 = dma.done [#allocation4], 128
    $region37: #{tpu_custom_call.1} parent=1 // pred_fallthru
      _
    // Predicated region
    $region38: #{tpu_custom_call.1} parent=1 // pred_check
      _
    $region39: #{tpu_custom_call.1} parent=1 // pred_check_branch
      %458 = sbr.rel (0) target = $region41
    $region40: #{tpu_custom_call.1} parent=1 // pred_region
      _
    $region41: #{tpu_custom_call.1} parent=1 // pred_fallthru
      _
    %459 = vsyncpa [#allocation3], 1
    %460 = vsyncpa [#allocation4], 1

</llo_original>
